<compile_context>
chip_gen: v7x
topology: tpu7x:2x2x1
jax: 0.10.0
libtpu: 0.0.40
codegen_flags: <defaults>
</compile_context>

<pallas_src>
import jax
import jax.numpy as jnp
from jax.experimental import pallas as pl
from jax.experimental.pallas import tpu as pltpu


# ---------------------------------------------------------------------------
# Kernel
# ---------------------------------------------------------------------------
def _discriminator_kernel(x_ref, w1_ref, wh_ref, w5_ref, b_ref, b5_ref, o_ref):
    # x_ref : (TM, n_z)        bf16  batch tile (double-buffered)
    # w1_ref: (n_z, hid_p)     bf16  layer-1 weights (resident, single-buffered)
    # wh_ref: (3, hid_p, hid_p)bf16  layers 2..4 weights (resident)
    # w5_ref: (8, hid_p)       bf16  row 0 = final-layer weights, rows 1..7 zero
    # b_ref : (4, hid_p)       f32   hidden-layer biases (resident)
    # b5_ref: (1, 1)           f32   final-layer bias (SMEM scalar)
    # o_ref : (1, TM)          f32   lane-dense output row for this batch tile

    # Layer 1: bf16 MXU matmul, f32 accumulation; bias + ReLU in f32 on the VPU.
    h = jnp.dot(x_ref[...], w1_ref[...], preferred_element_type=jnp.float32)
    h = jnp.maximum(h + b_ref[0:1, :], 0.0)

    # Hidden layers 2..4 (static unroll; static VMEM indexing of the packed stack).
    for l in range(3):
        h = jnp.dot(h.astype(jnp.bfloat16), wh_ref[l],
                    preferred_element_type=jnp.float32)
        h = jnp.maximum(h + b_ref[l + 1:l + 2, :], 0.0)

    # Final layer computed as w5_row @ h^T (trans-B contraction) so the logits
    # land directly as a lane-dense (1, TM) row; rows 1..7 of w5 are zero
    # sublane padding and are discarded.
    logits = jax.lax.dot_general(
        w5_ref[...], h.astype(jnp.bfloat16),
        dimension_numbers=(((1,), (1,)), ((), ())),
        preferred_element_type=jnp.float32)            # (8, TM)
    logits = logits[0:1, :] + b5_ref[0, 0]             # scalar -> vector splat

    # Sigmoid = 1 / (1 + exp(-x)) via EUP exp + approximate EUP reciprocal;
    # keeps the epilogue off the VPU/VALU slots.
    o_ref[...] = pl.reciprocal(1.0 + jnp.exp(-logits),
                               approx=True).astype(o_ref.dtype)


# ---------------------------------------------------------------------------
# Packing (hoisted out of the forward path; do once per optimizer step)
# ---------------------------------------------------------------------------
def _round_up(x, m):
    return ((x + m - 1) // m) * m


def pack_discriminator_params(params):
    """Cast to bf16, pad the hidden width to a multiple of 128 lanes, stack the
    square hidden layers and pack the biases.  Returns a cached pytree that the
    forward pass consumes directly (no per-call packing)."""
    (w1, b1), (w2, b2), (w3, b3), (w4, b4), (w5, b5) = params
    n_z, hid = w1.shape
    assert w5.shape[1] == 1, "Discriminator head must have exactly 1 output"
    hid_p = max(128, _round_up(hid, 128))

    def pad_w(w, rows, cols):
        out = jnp.zeros((rows, cols), jnp.bfloat16)
        return out.at[:w.shape[0], :w.shape[1]].set(w.astype(jnp.bfloat16))

    w1_p = pad_w(w1, n_z, hid_p)                                   # (n_z, hid_p)
    wh_p = jnp.stack([pad_w(w, hid_p, hid_p) for w in (w2, w3, w4)],
                     axis=0)                                       # (3, hid_p, hid_p)
    w5_p = jnp.zeros((8, hid_p), jnp.bfloat16).at[0, :hid].set(
        w5[:, 0].astype(jnp.bfloat16))                             # (8, hid_p)

    b_p = jnp.zeros((4, hid_p), jnp.float32)
    for i, b in enumerate((b1, b2, b3, b4)):
        b_p = b_p.at[i, :hid].set(b.reshape(-1).astype(jnp.float32))
    b5_p = jnp.asarray(b5, jnp.float32).reshape(1, 1)              # SMEM scalar

    return dict(w1=w1_p, wh=wh_p, w5=w5_p, b=b_p, b5=b5_p,
                n_z=int(n_z), hid=int(hid), hid_p=int(hid_p))


def _pick_tm(batch, tm):
    """Batch-tile size: multiple of 128, large enough to amortize the ~0.35 us
    per-grid-step overhead, shrunk for small batches, and split into >=2 tiles
    when the batch allows it so the parallel grid axis can shard across the two
    TensorCores on v7x (no effect on v5e/v6e)."""
    tm = max(128, (int(tm) // 128) * 128)
    b_up = _round_up(batch, 128)
    if b_up <= tm:
        tm = _round_up(b_up // 2, 128) if b_up >= 256 else b_up
    return tm


# ---------------------------------------------------------------------------
# Forward
# ---------------------------------------------------------------------------
def discriminator_forward(x, packed, *, tm=512):
    """x: (B, n_z) float32.  packed: output of pack_discriminator_params."""
    B, n_z = x.shape
    assert n_z == packed["n_z"]
    hid_p = packed["hid_p"]

    tm = _pick_tm(B, tm)
    num_tiles = pl.cdiv(B, tm)
    b_pad = num_tiles * tm

    x_bf = x.astype(jnp.bfloat16)
    if b_pad != B:                         # skip the pad when B % tm == 0
        x_bf = jnp.zeros((b_pad, n_z), jnp.bfloat16).at[:B, :].set(x_bf)

    # VMEM budget: resident weights (single-buffered) + double-buffered batch
    # tile and output row + f32 activation scratch, plus headroom.  Capped at
    # 48 MiB so a large (hid, tm) sweep still fits v7x's 64 MiB physical VMEM.
    resident = (packed["w1"].size + packed["wh"].size + packed["w5"].size) * 2 \
               + packed["b"].size * 4
    streaming = 2 * (tm * n_z * 2) + 2 * (tm * 4)
    scratch = 2 * tm * hid_p * 4
    vmem_limit = int(min(max(resident + streaming + scratch + (2 << 20),
                             8 << 20), 48 << 20))

    out = pl.pallas_call(
        _discriminator_kernel,
        out_shape=jax.ShapeDtypeStruct((num_tiles, 1, tm), jnp.float32),
        grid=(num_tiles,),
        in_specs=[
            # batch tile (streams; default double-buffering)
            pl.BlockSpec((tm, n_z), lambda i: (i, 0)),
            # resident operands: constant index_maps, single VMEM buffer each
            pl.BlockSpec((n_z, hid_p), lambda i: (0, 0),
                         pipeline_mode=pl.Buffered(1)),
            pl.BlockSpec((3, hid_p, hid_p), lambda i: (0, 0, 0),
                         pipeline_mode=pl.Buffered(1)),
            pl.BlockSpec((8, hid_p), lambda i: (0, 0),
                         pipeline_mode=pl.Buffered(1)),
            pl.BlockSpec((4, hid_p), lambda i: (0, 0),
                         pipeline_mode=pl.Buffered(1)),
            # final-layer bias as an SMEM scalar
            pl.BlockSpec(memory_space=pltpu.MemorySpace.SMEM),
        ],
        out_specs=pl.BlockSpec((None, 1, tm), lambda i: (i, 0, 0)),
        compiler_params=pltpu.CompilerParams(
            dimension_semantics=("parallel",),
            vmem_limit_bytes=vmem_limit),
    )(x_bf, packed["w1"], packed["wh"], packed["w5"], packed["b"], packed["b5"])

    # (num_tiles, 1, TM) lane-dense rows -> (B, 1) column, drop batch padding.
    return out.reshape(-1)[:B].reshape(B, 1)


# ---------------------------------------------------------------------------
# Reference / demo
# ---------------------------------------------------------------------------
def init_params(key, n_z, dim_h):
    """Deterministic synthetic init (uniform, scaled like PyTorch default)."""
    hid = dim_h * 4
    dims = [(n_z, hid), (hid, hid), (hid, hid), (hid, hid), (hid, 1)]
    params = []
    for fan_in, fan_out in dims:
        key, kw, kb = jax.random.split(key, 3)
        bound = 1.0 / jnp.sqrt(fan_in)
        w = jax.random.uniform(kw, (fan_in, fan_out), jnp.float32, -bound, bound)
        b = jax.random.uniform(kb, (1, fan_out), jnp.float32, -bound, bound)
        params.append((w, b))
    return params


def reference_forward(x, params):
    """Reference with the same mixed precision: bf16 matmul operands, f32 accum."""
    h = x
    for i, (w, b) in enumerate(params):
        h = jnp.dot(h.astype(jnp.bfloat16), w.astype(jnp.bfloat16),
                    preferred_element_type=jnp.float32) + b
        if i < len(params) - 1:
            h = jnp.maximum(h, 0.0)
    return jax.nn.sigmoid(h)


if __name__ == "__main__":
    # Small shapes consistent with the module: args.n_z=8, args.dim_h=8 -> hidden=32.
    batch, n_z, dim_h = 2, 8, 8

    key = jax.random.PRNGKey(0)
    key, kx = jax.random.split(key)
    x = jax.random.normal(kx, (batch, n_z), dtype=jnp.float32)
    params = init_params(key, n_z, dim_h)

    packed = pack_discriminator_params(params)      # once, outside forward path
    out = discriminator_forward(x, packed)
    out = jax.block_until_ready(out)

    ref = reference_forward(x, params)
    assert out.shape == (batch, 1), out.shape
    # Tolerance covers bf16 matmul operands + the approximate EUP reciprocal.
    assert jnp.allclose(out, ref, atol=2e-3, rtol=2e-3), (out, ref)

    print("KERNEL_OK")
</pallas_src>

<mosaic_0001>
module attributes {stable_mosaic.version = 11 : i64} {
  func.func @_discriminator_kernel(%arg0: i32, %arg1: memref<128x8xbf16, #tpu.memory_space<vmem>>, %arg2: memref<8x128xbf16, #tpu.memory_space<vmem>>, %arg3: memref<3x128x128xbf16, #tpu.memory_space<vmem>>, %arg4: memref<8x128xbf16, #tpu.memory_space<vmem>>, %arg5: memref<4x128xf32, #tpu.memory_space<vmem>>, %arg6: memref<1x1xf32, #tpu.memory_space<smem>>, %arg7: memref<1x1x128xf32, #tpu.memory_space<vmem>>) attributes {dimension_semantics = [#tpu.dimension_semantics<parallel>], iteration_bounds = array<i64: 1>, scalar_prefetch = 0 : i64, scratch_operands = 0 : i64, tpu.core_type = #tpu.core_type<tc>, window_params = [{transform_indices = @transform_0, window_bounds = array<i64: 128, 8>}, {pipeline_mode = #tpu.pipeline_mode<synchronous>, transform_indices = @transform_1, window_bounds = array<i64: 8, 128>}, {pipeline_mode = #tpu.pipeline_mode<synchronous>, transform_indices = @transform_2, window_bounds = array<i64: 3, 128, 128>}, {pipeline_mode = #tpu.pipeline_mode<synchronous>, transform_indices = @transform_3, window_bounds = array<i64: 8, 128>}, {pipeline_mode = #tpu.pipeline_mode<synchronous>, transform_indices = @transform_4, window_bounds = array<i64: 4, 128>}, {transform_indices = @transform_5, window_bounds = array<i64: 1, 1>}, {transform_indices = @transform_6, window_bounds = array<i64: 1, 1, 128>}]} {
    %c0 = arith.constant 0 : index
    %c0_0 = arith.constant 0 : index
    %0 = vector.load %arg1[%c0, %c0_0] : memref<128x8xbf16, #tpu.memory_space<vmem>>, vector<128x8xbf16>
    %c0_1 = arith.constant 0 : index
    %c0_2 = arith.constant 0 : index
    %1 = vector.load %arg2[%c0_1, %c0_2] : memref<8x128xbf16, #tpu.memory_space<vmem>>, vector<8x128xbf16>
    %cst = arith.constant dense<0.000000e+00> : vector<128x128xf32>
    %2 = tpu.matmul %0, %1, %cst {dimension_numbers = #tpu.dot_dimension_numbers<[1], [0], [0], [1], [0, 0, 1, 1], [], []>} : vector<128x8xbf16>, vector<8x128xbf16>, vector<128x128xf32> -> vector<128x128xf32>
    %c0_3 = arith.constant 0 : index
    %c0_4 = arith.constant 0 : index
    %3 = vector.load %arg5[%c0_3, %c0_4] : memref<4x128xf32, #tpu.memory_space<vmem>>, vector<1x128xf32>
    %4 = vector.broadcast %3 : vector<1x128xf32> to vector<128x128xf32>
    %5 = arith.addf %2, %4 : vector<128x128xf32>
    %cst_5 = arith.constant 0.000000e+00 : f32
    %6 = vector.broadcast %cst_5 : f32 to vector<128x128xf32>
    %7 = arith.maximumf %5, %6 : vector<128x128xf32>
    %8 = arith.truncf %7 : vector<128x128xf32> to vector<128x128xbf16>
    %c0_6 = arith.constant 0 : index
    %c0_7 = arith.constant 0 : index
    %c0_8 = arith.constant 0 : index
    %9 = vector.load %arg3[%c0_6, %c0_7, %c0_8] : memref<3x128x128xbf16, #tpu.memory_space<vmem>>, vector<1x128x128xbf16>
    %10 = vector.shape_cast %9 : vector<1x128x128xbf16> to vector<128x128xbf16>
    %cst_9 = arith.constant dense<0.000000e+00> : vector<128x128xf32>
    %11 = tpu.matmul %8, %10, %cst_9 {dimension_numbers = #tpu.dot_dimension_numbers<[1], [0], [0], [1], [0, 0, 1, 1], [], []>} : vector<128x128xbf16>, vector<128x128xbf16>, vector<128x128xf32> -> vector<128x128xf32>
    %c1 = arith.constant 1 : index
    %c0_10 = arith.constant 0 : index
    %12 = vector.load %arg5[%c1, %c0_10] : memref<4x128xf32, #tpu.memory_space<vmem>>, vector<1x128xf32>
    %13 = vector.broadcast %12 : vector<1x128xf32> to vector<128x128xf32>
    %14 = arith.addf %11, %13 : vector<128x128xf32>
    %cst_11 = arith.constant 0.000000e+00 : f32
    %15 = vector.broadcast %cst_11 : f32 to vector<128x128xf32>
    %16 = arith.maximumf %14, %15 : vector<128x128xf32>
    %17 = arith.truncf %16 : vector<128x128xf32> to vector<128x128xbf16>
    %c1_12 = arith.constant 1 : index
    %c0_13 = arith.constant 0 : index
    %c0_14 = arith.constant 0 : index
    %18 = vector.load %arg3[%c1_12, %c0_13, %c0_14] : memref<3x128x128xbf16, #tpu.memory_space<vmem>>, vector<1x128x128xbf16>
    %19 = vector.shape_cast %18 : vector<1x128x128xbf16> to vector<128x128xbf16>
    %cst_15 = arith.constant dense<0.000000e+00> : vector<128x128xf32>
    %20 = tpu.matmul %17, %19, %cst_15 {dimension_numbers = #tpu.dot_dimension_numbers<[1], [0], [0], [1], [0, 0, 1, 1], [], []>} : vector<128x128xbf16>, vector<128x128xbf16>, vector<128x128xf32> -> vector<128x128xf32>
    %c2 = arith.constant 2 : index
    %c0_16 = arith.constant 0 : index
    %21 = vector.load %arg5[%c2, %c0_16] : memref<4x128xf32, #tpu.memory_space<vmem>>, vector<1x128xf32>
    %22 = vector.broadcast %21 : vector<1x128xf32> to vector<128x128xf32>
    %23 = arith.addf %20, %22 : vector<128x128xf32>
    %cst_17 = arith.constant 0.000000e+00 : f32
    %24 = vector.broadcast %cst_17 : f32 to vector<128x128xf32>
    %25 = arith.maximumf %23, %24 : vector<128x128xf32>
    %26 = arith.truncf %25 : vector<128x128xf32> to vector<128x128xbf16>
    %c2_18 = arith.constant 2 : index
    %c0_19 = arith.constant 0 : index
    %c0_20 = arith.constant 0 : index
    %27 = vector.load %arg3[%c2_18, %c0_19, %c0_20] : memref<3x128x128xbf16, #tpu.memory_space<vmem>>, vector<1x128x128xbf16>
    %28 = vector.shape_cast %27 : vector<1x128x128xbf16> to vector<128x128xbf16>
    %cst_21 = arith.constant dense<0.000000e+00> : vector<128x128xf32>
    %29 = tpu.matmul %26, %28, %cst_21 {dimension_numbers = #tpu.dot_dimension_numbers<[1], [0], [0], [1], [0, 0, 1, 1], [], []>} : vector<128x128xbf16>, vector<128x128xbf16>, vector<128x128xf32> -> vector<128x128xf32>
    %c3 = arith.constant 3 : index
    %c0_22 = arith.constant 0 : index
    %30 = vector.load %arg5[%c3, %c0_22] : memref<4x128xf32, #tpu.memory_space<vmem>>, vector<1x128xf32>
    %31 = vector.broadcast %30 : vector<1x128xf32> to vector<128x128xf32>
    %32 = arith.addf %29, %31 : vector<128x128xf32>
    %cst_23 = arith.constant 0.000000e+00 : f32
    %33 = vector.broadcast %cst_23 : f32 to vector<128x128xf32>
    %34 = arith.maximumf %32, %33 : vector<128x128xf32>
    %c0_24 = arith.constant 0 : index
    %c0_25 = arith.constant 0 : index
    %35 = vector.load %arg4[%c0_24, %c0_25] : memref<8x128xbf16, #tpu.memory_space<vmem>>, vector<8x128xbf16>
    %36 = arith.truncf %34 : vector<128x128xf32> to vector<128x128xbf16>
    %cst_26 = arith.constant dense<0.000000e+00> : vector<8x128xf32>
    %37 = tpu.matmul %35, %36, %cst_26 {dimension_numbers = #tpu.dot_dimension_numbers<[1], [1], [0], [0], [0, 0, 1, 0], [], []>} : vector<8x128xbf16>, vector<128x128xbf16>, vector<8x128xf32> -> vector<8x128xf32>
    %38 = vector.extract_strided_slice %37 {offsets = [0, 0], sizes = [1, 128], strides = [1, 1]} : vector<8x128xf32> to vector<1x128xf32>
    %c0_27 = arith.constant 0 : index
    %c0_28 = arith.constant 0 : index
    %39 = memref.load %arg6[%c0_27, %c0_28] : memref<1x1xf32, #tpu.memory_space<smem>>
    %40 = vector.broadcast %39 : f32 to vector<1x128xf32>
    %41 = arith.addf %38, %40 : vector<1x128xf32>
    %cst_29 = arith.constant 0.000000e+00 : f32
    %42 = vector.broadcast %cst_29 : f32 to vector<1x128xf32>
    %43 = arith.subf %42, %41 : vector<1x128xf32>
    %44 = math.exp %43 : vector<1x128xf32>
    %cst_30 = arith.constant 1.000000e+00 : f32
    %45 = vector.broadcast %cst_30 : f32 to vector<1x128xf32>
    %46 = arith.addf %45, %44 : vector<1x128xf32>
    %47 = tpu.reciprocal %46 {approx = true} : vector<1x128xf32> -> vector<1x128xf32>
    %c0_31 = arith.constant 0 : index
    %c0_32 = arith.constant 0 : index
    %c0_33 = arith.constant 0 : index
    %48 = vector.load %arg7[%c0_31, %c0_32, %c0_33] : memref<1x1x128xf32, #tpu.memory_space<vmem>>, vector<1x1x128xf32>
    %49 = vector.shape_cast %48 : vector<1x1x128xf32> to vector<1x128xf32>
    %50 = vector.shape_cast %47 : vector<1x128xf32> to vector<1x1x128xf32>
    tpu.vector_store %arg7[%c0_31, %c0_32, %c0_33], %50 {strides = array<i32>} : memref<1x1x128xf32, #tpu.memory_space<vmem>>, vector<1x1x128xf32>,
    return
  }
  func.func @transform_0(%arg0: i32) -> (i32, i32) {
    %c0_i32 = arith.constant 0 : i32
    %c0_i32_0 = arith.constant 0 : i32
    return %arg0, %c0_i32 : i32, i32
  }
  func.func @transform_1(%arg0: i32) -> (i32, i32) {
    %c0_i32 = arith.constant 0 : i32
    %c0_i32_0 = arith.constant 0 : i32
    %c0_i32_1 = arith.constant 0 : i32
    return %c0_i32, %c0_i32_0 : i32, i32
  }
  func.func @transform_2(%arg0: i32) -> (i32, i32, i32) {
    %c0_i32 = arith.constant 0 : i32
    %c0_i32_0 = arith.constant 0 : i32
    %c0_i32_1 = arith.constant 0 : i32
    %c0_i32_2 = arith.constant 0 : i32
    return %c0_i32, %c0_i32_0, %c0_i32_1 : i32, i32, i32
  }
  func.func @transform_3(%arg0: i32) -> (i32, i32) {
    %c0_i32 = arith.constant 0 : i32
    %c0_i32_0 = arith.constant 0 : i32
    %c0_i32_1 = arith.constant 0 : i32
    return %c0_i32, %c0_i32_0 : i32, i32
  }
  func.func @transform_4(%arg0: i32) -> (i32, i32) {
    %c0_i32 = arith.constant 0 : i32
    %c0_i32_0 = arith.constant 0 : i32
    %c0_i32_1 = arith.constant 0 : i32
    return %c0_i32, %c0_i32_0 : i32, i32
  }
  func.func @transform_5(%arg0: i32) -> (i32, i32) {
    %c0_i32 = arith.constant 0 : i32
    %c0_i32_0 = arith.constant 0 : i32
    %c0_i32_1 = arith.constant 0 : i32
    return %c0_i32, %c0_i32_0 : i32, i32
  }
  func.func @transform_6(%arg0: i32) -> (i32, i32, i32) {
    %c0_i32 = arith.constant 0 : i32
    %c0_i32_0 = arith.constant 0 : i32
    %c0_i32_1 = arith.constant 0 : i32
    return %arg0, %c0_i32, %c0_i32_0 : i32, i32, i32
  }
}

</mosaic_0001>

<llo_original>
// kernel: tpu_custom_call.1
$region0: #{tpu_custom_call.1}
  #allocation0 [shape = 'u32[]', space=smem, size = 0x4, offset = 0x4, fixed_abs, tag = 'smem constant byte address 0x4 - core index']
  #allocation1 [shape = 'u32[144,128]{1,0:T(1,128)}', space=vmem, size = 0x12000, scoped, tag = 'internal scratch']
  #allocation2 [shape = 'f32[1,1]{1,0:T(1,128)S(6)}', space=smem, size = 0x200, scoped, tag = 'scoped memory for tpu_custom_call.1']
  %s0 = inlined_call_operand.vmem [shape: bf16[128,8], index: 0, kind: input, shape index: {}]
  %s1 = inlined_call_operand.vmem [shape: bf16[8,128], index: 1, kind: input, shape index: {}]
  %s2 = inlined_call_operand.hbm [shape: bf16[3,128,128], index: 2, kind: input, shape index: {}]
  %s3 = inlined_call_operand.vmem [shape: bf16[8,128], index: 3, kind: input, shape index: {}]
  %s4 = inlined_call_operand.vmem [shape: f32[4,128], index: 4, kind: input, shape index: {}]
  %s5 = inlined_call_operand.<no memory space> [shape: f32[1,1], index: 5, kind: input, shape index: {}]
  %s6 = inlined_call_operand.hbm [shape: f32[1,1,128], index: 6, kind: output, shape index: {}]
  %s7 = sld [smem:[#allocation0]]
  $region38: #{tpu_custom_call.1} parent=0
    _
  %s9 = ssub.s32 1, %s7
  %s10 = scalar_select 0, %s9, %s7
  %11 = sst [smem:[#allocation2]] %s5
  $region1: #{tpu_custom_call.1} parent=0
    #allocation3 [shape = 'u8[98304]{0}', space=vmem, size = 0x18000, scoped, tag = 'input window, operand 2, single buffered']
    #allocation4 [shape = 's32[1]{0}', space=sflag, size = 0x4, scoped, tag = 'scoped memory for tpu_custom_call.1']
    #allocation5 [shape = 's32[1]{0}', space=sflag, size = 0x4, scoped, tag = 'scoped memory for tpu_custom_call.1']
    #allocation6 [shape = 'u8[512]{0}', space=vmem, size = 0x400, scoped, tag = 'output window, operand 0, single buffered']
    %12 = vsyncpa [#allocation4], 0
    %13 = vsyncpa [#allocation5], 0
    // Predicated region
    $region2: #{tpu_custom_call.1} parent=1 // pred_check
      _
    $region3: #{tpu_custom_call.1} parent=1 // pred_check_branch
      %15 = sbr.rel (0) target = $region5
    $region4: #{tpu_custom_call.1} parent=1 // pred_region
      _
    $region5: #{tpu_custom_call.1} parent=1 // pred_fallthru
      _
    // Predicated region
    $region6: #{tpu_custom_call.1} parent=1 // pred_check
      _
    $region7: #{tpu_custom_call.1} parent=1 // pred_check_branch
      %17 = sbr.rel (0) target = $region9
    $region8: #{tpu_custom_call.1} parent=1 // pred_region
      _
    $region9: #{tpu_custom_call.1} parent=1 // pred_fallthru
      _
    // Predicated region
    $region10: #{tpu_custom_call.1} parent=1 // pred_check
      _
    $region11: #{tpu_custom_call.1} parent=1 // pred_check_branch
      %19 = sbr.rel (0) target = $region13
    $region12: #{tpu_custom_call.1} parent=1 // pred_region
      %s21 = ssub.s32 3072, 3072
      %22 = vsyncadd [#allocation4], %s21
      %s23 = sshll.u32 [#allocation3], 4
      %s24 = int_to_ptr.vmem [resolvable:$true] %s23
      %29 = dma.hbm_to_vmem [thread:$0]  %s2, 3072, %s24, [#allocation4], 64, 64, 4
    $region13: #{tpu_custom_call.1} parent=1 // pred_fallthru
      _
    // Predicated region
    $region14: #{tpu_custom_call.1} parent=1 // pred_check
      _
    $region15: #{tpu_custom_call.1} parent=1 // pred_check_branch
      %31 = sbr.rel (0) target = $region17
    $region16: #{tpu_custom_call.1} parent=1 // pred_region
      _
    $region17: #{tpu_custom_call.1} parent=1 // pred_fallthru
      _
    // Predicated region
    $region18: #{tpu_custom_call.1} parent=1 // pred_check
      _
    $region19: #{tpu_custom_call.1} parent=1 // pred_check_branch
      %33 = sbr.rel (0) target = $region21
    $region20: #{tpu_custom_call.1} parent=1 // pred_region
      _
    $region21: #{tpu_custom_call.1} parent=1 // pred_fallthru
      _
    // Predicated region
    $region22: #{tpu_custom_call.1} parent=1 // pred_check
      _
    $region23: #{tpu_custom_call.1} parent=1 // pred_check_branch
      %35 = sbr.rel (0) target = $region25
    $region24: #{tpu_custom_call.1} parent=1 // pred_region
      _
    $region25: #{tpu_custom_call.1} parent=1 // pred_fallthru
      _
    // Predicated region
    $region26: #{tpu_custom_call.1} parent=1 // pred_check
      _
    $region27: #{tpu_custom_call.1} parent=1 // pred_check_branch
      %37 = sbr.rel (0) target = $region29
    $region28: #{tpu_custom_call.1} parent=1 // pred_region
      %38 = dma.done [#allocation4], 3072
    $region29: #{tpu_custom_call.1} parent=1 // pred_fallthru
      _
    %v40 = vld [vmem:[%s0] sm:$0xf]
    %v41 = vld [vmem:[%s0 + $0x4] sm:$0xf]
    %v42 = vld [vmem:[%s0 + $0x8] sm:$0xf]
    %v43 = vld [vmem:[%s0 + $0xc] sm:$0xf]
    %v44 = vld [vmem:[%s0 + $0x10] sm:$0xf]
    %v45 = vld [vmem:[%s0 + $0x14] sm:$0xf]
    %v46 = vld [vmem:[%s0 + $0x18] sm:$0xf]
    %v47 = vld [vmem:[%s0 + $0x1c] sm:$0xf]
    %v48 = vld [vmem:[%s0 + $0x20] sm:$0xf]
    %v49 = vld [vmem:[%s0 + $0x24] sm:$0xf]
    %v50 = vld [vmem:[%s0 + $0x28] sm:$0xf]
    %v51 = vld [vmem:[%s0 + $0x2c] sm:$0xf]
    %v52 = vld [vmem:[%s0 + $0x30] sm:$0xf]
    %v53 = vld [vmem:[%s0 + $0x34] sm:$0xf]
    %v54 = vld [vmem:[%s0 + $0x38] sm:$0xf]
    %v55 = vld [vmem:[%s0 + $0x3c] sm:$0xf]
    %v56 = vld [vmem:[%s1] sm:$0xf]
    %v57 = vld [vmem:[%s4] sm:$0x1]
    %v58 = vlaneseq
    %v59 = vshrl.u32 %v58, 7
    %v60 = vsub.s32 0, %v59
    %v61 = vrot.slane %v57, %v60
    %v78 = vunpack.c.l.b16 %v40
    %v79 = vunpack.c.l.b16 %v41
    %v80 = vunpack.c.l.b16 %v42
    %v81 = vunpack.c.l.b16 %v43
    %v82 = vunpack.c.l.b16 %v44
    %v83 = vunpack.c.l.b16 %v45
    %v84 = vunpack.c.l.b16 %v46
    %v85 = vunpack.c.l.b16 %v47
    %v86 = vunpack.c.l.b16 %v48
    %v87 = vunpack.c.l.b16 %v49
    %v88 = vunpack.c.l.b16 %v50
    %v89 = vunpack.c.l.b16 %v51
    %v90 = vunpack.c.l.b16 %v52
    %v91 = vunpack.c.l.b16 %v53
    %v92 = vunpack.c.l.b16 %v54
    %v93 = vunpack.c.l.b16 %v55
    %v94 = vpack.c.b16 %v79, %v78
    %v95 = vpack.c.b16 %v81, %v80
    %v96 = vpack.c.b16 %v83, %v82
    %v97 = vpack.c.b16 %v85, %v84
    %v98 = vpack.c.b16 %v87, %v86
    %v99 = vpack.c.b16 %v89, %v88
    %v100 = vpack.c.b16 %v91, %v90
    %v101 = vpack.c.b16 %v93, %v92
    %vm102 = vcmask 64512
    %v104 = vsel %vm102, %v94, 0
    %v107 = vsel %vm102, %v95, 0
    %v110 = vsel %vm102, %v96, 0
    %v113 = vsel %vm102, %v97, 0
    %v116 = vsel %vm102, %v98, 0
    %v119 = vsel %vm102, %v99, 0
    %v122 = vsel %vm102, %v100, 0
    %v125 = vsel %vm102, %v101, 0
    %vm127 = vcmask 1043456
    %v129 = vsel %vm127, %v56, 0
    %131 = vmatprep.subr.bf16.mxu0 0
    %132 = vmatpush1.bf16.msra.mxu0 %v129
    %133 = vmatprep.subr.bf16.mxu0 0
    %134 = vmatpush1.bf16.msra.mxu0 0
    %135 = vmatprep.subr.bf16.mxu0 0
    %136 = vmatpush1.bf16.msra.mxu0 0
    %137 = vmatprep.subr.bf16.mxu0 0
    %138 = vmatpush1.bf16.msra.mxu0 0
    %139 = vmatprep.subr.bf16.mxu0 0
    %140 = vmatpush1.bf16.msra.mxu0 0
    %141 = vmatprep.subr.bf16.mxu0 0
    %142 = vmatpush1.bf16.msra.mxu0 0
    %143 = vmatprep.subr.bf16.mxu0 0
    %144 = vmatpush1.bf16.msra.mxu0 0
    %145 = vmatprep.subr.bf16.mxu0 0
    %146 = vmatpush1.bf16.msra.mxu0 0
    %147 = vmatprep.subr.bf16.mxu0 0
    %148 = vmatpush1.bf16.msra.mxu0 0
    %149 = vmatprep.subr.bf16.mxu0 0
    %150 = vmatpush1.bf16.msra.mxu0 0
    %151 = vmatprep.subr.bf16.mxu0 0
    %152 = vmatpush1.bf16.msra.mxu0 0
    %153 = vmatprep.subr.bf16.mxu0 0
    %154 = vmatpush1.bf16.msra.mxu0 0
    %155 = vmatprep.subr.bf16.mxu0 0
    %156 = vmatpush1.bf16.msra.mxu0 0
    %157 = vmatprep.subr.bf16.mxu0 0
    %158 = vmatpush1.bf16.msra.mxu0 0
    %159 = vmatprep.subr.bf16.mxu0 0
    %160 = vmatpush1.bf16.msra.mxu0 0
    %161 = vmatprep.subr.bf16.mxu0 0
    %162 = vmatpush1.bf16.msra.mxu0 0
    %163 = vmatprep.mubr.bf16.mxu0 0
    %164 = vmatmul.mubr.bf16.gmra.mrb[0].mxu0 %v104
    %v165 = vpop.f32.mrb[0].mxu0
    %v166 = vadd.f32 %v61, %v165
    %v167 = vpop.f32.mrb[0].mxu0
    %v168 = vpop.f32.mrb[0].mxu0
    %v169 = vadd.f32 %v61, %v168
    %v170 = vpop.f32.mrb[0].mxu0
    %171 = vmatprep.mubr.bf16.mxu0 0
    %172 = vmatmul.mubr.bf16.gmra.mrb[0].mxu0 %v107
    %v173 = vpop.f32.mrb[0].mxu0
    %v174 = vadd.f32 %v61, %v173
    %v175 = vpop.f32.mrb[0].mxu0
    %v176 = vpop.f32.mrb[0].mxu0
    %v177 = vadd.f32 %v61, %v176
    %v178 = vpop.f32.mrb[0].mxu0
    %179 = vmatprep.mubr.bf16.mxu0 0
    %180 = vmatmul.mubr.bf16.gmra.mrb[0].mxu0 %v110
    %v181 = vpop.f32.mrb[0].mxu0
    %v182 = vadd.f32 %v61, %v181
    %v183 = vpop.f32.mrb[0].mxu0
    %v184 = vpop.f32.mrb[0].mxu0
    %v185 = vadd.f32 %v61, %v184
    %v186 = vpop.f32.mrb[0].mxu0
    %187 = vmatprep.mubr.bf16.mxu0 0
    %188 = vmatmul.mubr.bf16.gmra.mrb[0].mxu0 %v113
    %v189 = vpop.f32.mrb[0].mxu0
    %v190 = vadd.f32 %v61, %v189
    %v191 = vpop.f32.mrb[0].mxu0
    %v192 = vpop.f32.mrb[0].mxu0
    %v193 = vadd.f32 %v61, %v192
    %v194 = vpop.f32.mrb[0].mxu0
    %195 = vmatprep.mubr.bf16.mxu0 0
    %196 = vmatmul.mubr.bf16.gmra.mrb[0].mxu0 %v116
    %v197 = vpop.f32.mrb[0].mxu0
    %v198 = vadd.f32 %v61, %v197
    %v199 = vpop.f32.mrb[0].mxu0
    %v200 = vpop.f32.mrb[0].mxu0
    %v201 = vadd.f32 %v61, %v200
    %v202 = vpop.f32.mrb[0].mxu0
    %203 = vmatprep.mubr.bf16.mxu0 0
    %204 = vmatmul.mubr.bf16.gmra.mrb[0].mxu0 %v119
    %v205 = vpop.f32.mrb[0].mxu0
    %v206 = vadd.f32 %v61, %v205
    %v207 = vpop.f32.mrb[0].mxu0
    %v208 = vpop.f32.mrb[0].mxu0
    %v209 = vadd.f32 %v61, %v208
    %v210 = vpop.f32.mrb[0].mxu0
    %211 = vmatprep.mubr.bf16.mxu0 0
    %212 = vmatmul.mubr.bf16.gmra.mrb[0].mxu0 %v122
    %v213 = vpop.f32.mrb[0].mxu0
    %v214 = vadd.f32 %v61, %v213
    %v215 = vpop.f32.mrb[0].mxu0
    %v216 = vpop.f32.mrb[0].mxu0
    %v217 = vadd.f32 %v61, %v216
    %v218 = vpop.f32.mrb[0].mxu0
    %219 = vmatprep.mubr.bf16.mxu0 0
    %220 = vmatmul.mubr.bf16.gmra.mrb[0].mxu0 %v125
    %v221 = vpop.f32.mrb[0].mxu0
    %v222 = vadd.f32 %v61, %v221
    %v223 = vpop.f32.mrb[0].mxu0
    %v224 = vpop.f32.mrb[0].mxu0
    %v225 = vadd.f32 %v61, %v224
    %v226 = vpop.f32.mrb[0].mxu0
    %227 = vdwg.mxu0
    %v228 = vmax.f32 %v166, 0.0
    %v229 = vmax.f32 %v169, 0.0
    %v230 = vmax.f32 %v174, 0.0
    %v231 = vmax.f32 %v177, 0.0
    %v232 = vmax.f32 %v182, 0.0
    %v233 = vmax.f32 %v185, 0.0
    %v234 = vmax.f32 %v190, 0.0
    %v235 = vmax.f32 %v193, 0.0
    %v236 = vmax.f32 %v198, 0.0
    %v237 = vmax.f32 %v201, 0.0
    %v238 = vmax.f32 %v206, 0.0
    %v239 = vmax.f32 %v209, 0.0
    %v240 = vmax.f32 %v214, 0.0
    %v241 = vmax.f32 %v217, 0.0
    %v242 = vmax.f32 %v222, 0.0
    %v243 = vmax.f32 %v225, 0.0
    %v244 = vpack.c.bf16 %v229, %v228
    %v245 = vpack.c.bf16 %v231, %v230
    %v246 = vpack.c.bf16 %v233, %v232
    %v247 = vpack.c.bf16 %v235, %v234
    %v248 = vpack.c.bf16 %v237, %v236
    %v249 = vpack.c.bf16 %v239, %v238
    %v250 = vpack.c.bf16 %v241, %v240
    %v251 = vpack.c.bf16 %v243, %v242
    %v252 = vld [vmem:[#allocation3] sm:$0xf]
    %v253 = vld [vmem:[#allocation3 + $0x4] sm:$0xf]
    %v254 = vld [vmem:[#allocation3 + $0x8] sm:$0xf]
    %v255 = vld [vmem:[#allocation3 + $0xc] sm:$0xf]
    %v256 = vld [vmem:[#allocation3 + $0x10] sm:$0xf]
    %v257 = vld [vmem:[#allocation3 + $0x14] sm:$0xf]
    %v258 = vld [vmem:[#allocation3 + $0x18] sm:$0xf]
    %v259 = vld [vmem:[#allocation3 + $0x1c] sm:$0xf]
    %v260 = vld [vmem:[#allocation3 + $0x20] sm:$0xf]
    %v261 = vld [vmem:[#allocation3 + $0x24] sm:$0xf]
    %v262 = vld [vmem:[#allocation3 + $0x28] sm:$0xf]
    %v263 = vld [vmem:[#allocation3 + $0x2c] sm:$0xf]
    %v264 = vld [vmem:[#allocation3 + $0x30] sm:$0xf]
    %v265 = vld [vmem:[#allocation3 + $0x34] sm:$0xf]
    %v266 = vld [vmem:[#allocation3 + $0x38] sm:$0xf]
    %v267 = vld [vmem:[#allocation3 + $0x3c] sm:$0xf]
    %v268 = vld [vmem:[%s4 + $0x1] sm:$0x1]
    %v269 = vlaneseq
    %v270 = vshrl.u32 %v269, 7
    %v271 = vsub.s32 0, %v270
    %v272 = vrot.slane %v268, %v271
    %v289 = vunpack.c.l.b16 %v252
    %v290 = vunpack.c.l.b16 %v253
    %v291 = vunpack.c.l.b16 %v254
    %v292 = vunpack.c.l.b16 %v255
    %v293 = vunpack.c.l.b16 %v256
    %v294 = vunpack.c.l.b16 %v257
    %v295 = vunpack.c.l.b16 %v258
    %v296 = vunpack.c.l.b16 %v259
    %v297 = vunpack.c.l.b16 %v260
    %v298 = vunpack.c.l.b16 %v261
    %v299 = vunpack.c.l.b16 %v262
    %v300 = vunpack.c.l.b16 %v263
    %v301 = vunpack.c.l.b16 %v264
    %v302 = vunpack.c.l.b16 %v265
    %v303 = vunpack.c.l.b16 %v266
    %v304 = vunpack.c.l.b16 %v267
    %v305 = vpack.c.b16 %v290, %v289
    %v306 = vpack.c.b16 %v292, %v291
    %v307 = vpack.c.b16 %v294, %v293
    %v308 = vpack.c.b16 %v296, %v295
    %v309 = vpack.c.b16 %v298, %v297
    %v310 = vpack.c.b16 %v300, %v299
    %v311 = vpack.c.b16 %v302, %v301
    %v312 = vpack.c.b16 %v304, %v303
    %321 = vmatprep.subr.bf16.mxu0 0
    %322 = vmatpush1.bf16.msra.mxu0 %v305
    %323 = vmatprep.subr.bf16.mxu0 0
    %324 = vmatpush1.bf16.msra.mxu0 %v306
    %325 = vmatprep.subr.bf16.mxu0 0
    %326 = vmatpush1.bf16.msra.mxu0 %v307
    %327 = vmatprep.subr.bf16.mxu0 0
    %328 = vmatpush1.bf16.msra.mxu0 %v308
    %329 = vmatprep.subr.bf16.mxu0 0
    %330 = vmatpush1.bf16.msra.mxu0 %v309
    %331 = vmatprep.subr.bf16.mxu0 0
    %332 = vmatpush1.bf16.msra.mxu0 %v310
    %333 = vmatprep.subr.bf16.mxu0 0
    %334 = vmatpush1.bf16.msra.mxu0 %v311
    %335 = vmatprep.subr.bf16.mxu0 0
    %336 = vmatpush1.bf16.msra.mxu0 %v312
    %337 = vmatprep.subr.bf16.mxu0 0
    %338 = vmatpush1.bf16.msra.mxu0 0
    %339 = vmatprep.subr.bf16.mxu0 0
    %340 = vmatpush1.bf16.msra.mxu0 0
    %341 = vmatprep.subr.bf16.mxu0 0
    %342 = vmatpush1.bf16.msra.mxu0 0
    %343 = vmatprep.subr.bf16.mxu0 0
    %344 = vmatpush1.bf16.msra.mxu0 0
    %345 = vmatprep.subr.bf16.mxu0 0
    %346 = vmatpush1.bf16.msra.mxu0 0
    %347 = vmatprep.subr.bf16.mxu0 0
    %348 = vmatpush1.bf16.msra.mxu0 0
    %349 = vmatprep.subr.bf16.mxu0 0
    %350 = vmatpush1.bf16.msra.mxu0 0
    %351 = vmatprep.subr.bf16.mxu0 0
    %352 = vmatpush1.bf16.msra.mxu0 0
    %353 = vmatprep.mubr.bf16.mxu0 0
    %354 = vmatmul.mubr.bf16.gmra.mrb[0].mxu0 %v244
    %v355 = vpop.f32.mrb[0].mxu0
    %v356 = vadd.f32 %v272, %v355
    %v357 = vpop.f32.mrb[0].mxu0
    %v358 = vpop.f32.mrb[0].mxu0
    %v359 = vadd.f32 %v272, %v358
    %v360 = vpop.f32.mrb[0].mxu0
    %361 = vmatprep.mubr.bf16.mxu0 0
    %362 = vmatmul.mubr.bf16.gmra.mrb[0].mxu0 %v245
    %v363 = vpop.f32.mrb[0].mxu0
    %v364 = vadd.f32 %v272, %v363
    %v365 = vpop.f32.mrb[0].mxu0
    %v366 = vpop.f32.mrb[0].mxu0
    %v367 = vadd.f32 %v272, %v366
    %v368 = vpop.f32.mrb[0].mxu0
    %369 = vmatprep.mubr.bf16.mxu0 0
    %370 = vmatmul.mubr.bf16.gmra.mrb[0].mxu0 %v246
    %v371 = vpop.f32.mrb[0].mxu0
    %v372 = vadd.f32 %v272, %v371
    %v373 = vpop.f32.mrb[0].mxu0
    %v374 = vpop.f32.mrb[0].mxu0
    %v375 = vadd.f32 %v272, %v374
    %v376 = vpop.f32.mrb[0].mxu0
    %377 = vmatprep.mubr.bf16.mxu0 0
    %378 = vmatmul.mubr.bf16.gmra.mrb[0].mxu0 %v247
    %v379 = vpop.f32.mrb[0].mxu0
    %v380 = vadd.f32 %v272, %v379
    %v381 = vpop.f32.mrb[0].mxu0
    %v382 = vpop.f32.mrb[0].mxu0
    %v383 = vadd.f32 %v272, %v382
    %v384 = vpop.f32.mrb[0].mxu0
    %385 = vmatprep.mubr.bf16.mxu0 0
    %386 = vmatmul.mubr.bf16.gmra.mrb[0].mxu0 %v248
    %v387 = vpop.f32.mrb[0].mxu0
    %v388 = vadd.f32 %v272, %v387
    %v389 = vpop.f32.mrb[0].mxu0
    %v390 = vpop.f32.mrb[0].mxu0
    %v391 = vadd.f32 %v272, %v390
    %v392 = vpop.f32.mrb[0].mxu0
    %393 = vmatprep.mubr.bf16.mxu0 0
    %394 = vmatmul.mubr.bf16.gmra.mrb[0].mxu0 %v249
    %v395 = vpop.f32.mrb[0].mxu0
    %v396 = vadd.f32 %v272, %v395
    %v397 = vpop.f32.mrb[0].mxu0
    %v398 = vpop.f32.mrb[0].mxu0
    %v399 = vadd.f32 %v272, %v398
    %v400 = vpop.f32.mrb[0].mxu0
    %401 = vmatprep.mubr.bf16.mxu0 0
    %402 = vmatmul.mubr.bf16.gmra.mrb[0].mxu0 %v250
    %v403 = vpop.f32.mrb[0].mxu0
    %v404 = vadd.f32 %v272, %v403
    %v405 = vpop.f32.mrb[0].mxu0
    %v406 = vpop.f32.mrb[0].mxu0
    %v407 = vadd.f32 %v272, %v406
    %v408 = vpop.f32.mrb[0].mxu0
    %409 = vmatprep.mubr.bf16.mxu0 0
    %410 = vmatmul.mubr.bf16.gmra.mrb[0].mxu0 %v251
    %v411 = vpop.f32.mrb[0].mxu0
    %v412 = vadd.f32 %v272, %v411
    %v413 = vpop.f32.mrb[0].mxu0
    %v414 = vpop.f32.mrb[0].mxu0
    %v415 = vadd.f32 %v272, %v414
    %v416 = vpop.f32.mrb[0].mxu0
    %417 = vdwg.mxu0
    %v418 = vmax.f32 %v356, 0.0
    %v419 = vmax.f32 %v359, 0.0
    %v420 = vmax.f32 %v364, 0.0
    %v421 = vmax.f32 %v367, 0.0
    %v422 = vmax.f32 %v372, 0.0
    %v423 = vmax.f32 %v375, 0.0
    %v424 = vmax.f32 %v380, 0.0
    %v425 = vmax.f32 %v383, 0.0
    %v426 = vmax.f32 %v388, 0.0
    %v427 = vmax.f32 %v391, 0.0
    %v428 = vmax.f32 %v396, 0.0
    %v429 = vmax.f32 %v399, 0.0
    %v430 = vmax.f32 %v404, 0.0
    %v431 = vmax.f32 %v407, 0.0
    %v432 = vmax.f32 %v412, 0.0
    %v433 = vmax.f32 %v415, 0.0
    %v434 = vpack.c.bf16 %v419, %v418
    %v435 = vpack.c.bf16 %v421, %v420
    %v436 = vpack.c.bf16 %v423, %v422
    %v437 = vpack.c.bf16 %v425, %v424
    %v438 = vpack.c.bf16 %v427, %v426
    %v439 = vpack.c.bf16 %v429, %v428
    %v440 = vpack.c.bf16 %v431, %v430
    %v441 = vpack.c.bf16 %v433, %v432
    %s442 = scalar_lea.vmem [#allocation3], 64
    %v443 = vld [vmem:[%s442] sm:$0xf]
    %v444 = vld [vmem:[%s442 + $0x4] sm:$0xf]
    %v445 = vld [vmem:[%s442 + $0x8] sm:$0xf]
    %v446 = vld [vmem:[%s442 + $0xc] sm:$0xf]
    %v447 = vld [vmem:[%s442 + $0x10] sm:$0xf]
    %v448 = vld [vmem:[%s442 + $0x14] sm:$0xf]
    %v449 = vld [vmem:[%s442 + $0x18] sm:$0xf]
    %v450 = vld [vmem:[%s442 + $0x1c] sm:$0xf]
    %v451 = vld [vmem:[%s442 + $0x20] sm:$0xf]
    %v452 = vld [vmem:[%s442 + $0x24] sm:$0xf]
    %v453 = vld [vmem:[%s442 + $0x28] sm:$0xf]
    %v454 = vld [vmem:[%s442 + $0x2c] sm:$0xf]
    %v455 = vld [vmem:[%s442 + $0x30] sm:$0xf]
    %v456 = vld [vmem:[%s442 + $0x34] sm:$0xf]
    %v457 = vld [vmem:[%s442 + $0x38] sm:$0xf]
    %v458 = vld [vmem:[%s442 + $0x3c] sm:$0xf]
    %v459 = vld [vmem:[%s4 + $0x2] sm:$0x1]
    %v460 = vlaneseq
    %v461 = vshrl.u32 %v460, 7
    %v462 = vsub.s32 0, %v461
    %v463 = vrot.slane %v459, %v462
    %v480 = vunpack.c.l.b16 %v443
    %v481 = vunpack.c.l.b16 %v444
    %v482 = vunpack.c.l.b16 %v445
    %v483 = vunpack.c.l.b16 %v446
    %v484 = vunpack.c.l.b16 %v447
    %v485 = vunpack.c.l.b16 %v448
    %v486 = vunpack.c.l.b16 %v449
    %v487 = vunpack.c.l.b16 %v450
    %v488 = vunpack.c.l.b16 %v451
    %v489 = vunpack.c.l.b16 %v452
    %v490 = vunpack.c.l.b16 %v453
    %v491 = vunpack.c.l.b16 %v454
    %v492 = vunpack.c.l.b16 %v455
    %v493 = vunpack.c.l.b16 %v456
    %v494 = vunpack.c.l.b16 %v457
    %v495 = vunpack.c.l.b16 %v458
    %v496 = vpack.c.b16 %v481, %v480
    %v497 = vpack.c.b16 %v483, %v482
    %v498 = vpack.c.b16 %v485, %v484
    %v499 = vpack.c.b16 %v487, %v486
    %v500 = vpack.c.b16 %v489, %v488
    %v501 = vpack.c.b16 %v491, %v490
    %v502 = vpack.c.b16 %v493, %v492
    %v503 = vpack.c.b16 %v495, %v494
    %512 = vmatprep.subr.bf16.mxu0 0
    %513 = vmatpush1.bf16.msra.mxu0 %v496
    %514 = vmatprep.subr.bf16.mxu0 0
    %515 = vmatpush1.bf16.msra.mxu0 %v497
    %516 = vmatprep.subr.bf16.mxu0 0
    %517 = vmatpush1.bf16.msra.mxu0 %v498
    %518 = vmatprep.subr.bf16.mxu0 0
    %519 = vmatpush1.bf16.msra.mxu0 %v499
    %520 = vmatprep.subr.bf16.mxu0 0
    %521 = vmatpush1.bf16.msra.mxu0 %v500
    %522 = vmatprep.subr.bf16.mxu0 0
    %523 = vmatpush1.bf16.msra.mxu0 %v501
    %524 = vmatprep.subr.bf16.mxu0 0
    %525 = vmatpush1.bf16.msra.mxu0 %v502
    %526 = vmatprep.subr.bf16.mxu0 0
    %527 = vmatpush1.bf16.msra.mxu0 %v503
    %528 = vmatprep.subr.bf16.mxu0 0
    %529 = vmatpush1.bf16.msra.mxu0 0
    %530 = vmatprep.subr.bf16.mxu0 0
    %531 = vmatpush1.bf16.msra.mxu0 0
    %532 = vmatprep.subr.bf16.mxu0 0
    %533 = vmatpush1.bf16.msra.mxu0 0
    %534 = vmatprep.subr.bf16.mxu0 0
    %535 = vmatpush1.bf16.msra.mxu0 0
    %536 = vmatprep.subr.bf16.mxu0 0
    %537 = vmatpush1.bf16.msra.mxu0 0
    %538 = vmatprep.subr.bf16.mxu0 0
    %539 = vmatpush1.bf16.msra.mxu0 0
    %540 = vmatprep.subr.bf16.mxu0 0
    %541 = vmatpush1.bf16.msra.mxu0 0
    %542 = vmatprep.subr.bf16.mxu0 0
    %543 = vmatpush1.bf16.msra.mxu0 0
    %544 = vmatprep.mubr.bf16.mxu0 0
    %545 = vmatmul.mubr.bf16.gmra.mrb[0].mxu0 %v434
    %v546 = vpop.f32.mrb[0].mxu0
    %v547 = vadd.f32 %v463, %v546
    %v548 = vpop.f32.mrb[0].mxu0
    %v549 = vpop.f32.mrb[0].mxu0
    %v550 = vadd.f32 %v463, %v549
    %v551 = vpop.f32.mrb[0].mxu0
    %552 = vmatprep.mubr.bf16.mxu0 0
    %553 = vmatmul.mubr.bf16.gmra.mrb[0].mxu0 %v435
    %v554 = vpop.f32.mrb[0].mxu0
    %v555 = vadd.f32 %v463, %v554
    %v556 = vpop.f32.mrb[0].mxu0
    %v557 = vpop.f32.mrb[0].mxu0
    %v558 = vadd.f32 %v463, %v557
    %v559 = vpop.f32.mrb[0].mxu0
    %560 = vmatprep.mubr.bf16.mxu0 0
    %561 = vmatmul.mubr.bf16.gmra.mrb[0].mxu0 %v436
    %v562 = vpop.f32.mrb[0].mxu0
    %v563 = vadd.f32 %v463, %v562
    %v564 = vpop.f32.mrb[0].mxu0
    %v565 = vpop.f32.mrb[0].mxu0
    %v566 = vadd.f32 %v463, %v565
    %v567 = vpop.f32.mrb[0].mxu0
    %568 = vmatprep.mubr.bf16.mxu0 0
    %569 = vmatmul.mubr.bf16.gmra.mrb[0].mxu0 %v437
    %v570 = vpop.f32.mrb[0].mxu0
    %v571 = vadd.f32 %v463, %v570
    %v572 = vpop.f32.mrb[0].mxu0
    %v573 = vpop.f32.mrb[0].mxu0
    %v574 = vadd.f32 %v463, %v573
    %v575 = vpop.f32.mrb[0].mxu0
    %576 = vmatprep.mubr.bf16.mxu0 0
    %577 = vmatmul.mubr.bf16.gmra.mrb[0].mxu0 %v438
    %v578 = vpop.f32.mrb[0].mxu0
    %v579 = vadd.f32 %v463, %v578
    %v580 = vpop.f32.mrb[0].mxu0
    %v581 = vpop.f32.mrb[0].mxu0
    %v582 = vadd.f32 %v463, %v581
    %v583 = vpop.f32.mrb[0].mxu0
    %584 = vmatprep.mubr.bf16.mxu0 0
    %585 = vmatmul.mubr.bf16.gmra.mrb[0].mxu0 %v439
    %v586 = vpop.f32.mrb[0].mxu0
    %v587 = vadd.f32 %v463, %v586
    %v588 = vpop.f32.mrb[0].mxu0
    %v589 = vpop.f32.mrb[0].mxu0
    %v590 = vadd.f32 %v463, %v589
    %v591 = vpop.f32.mrb[0].mxu0
    %592 = vmatprep.mubr.bf16.mxu0 0
    %593 = vmatmul.mubr.bf16.gmra.mrb[0].mxu0 %v440
    %v594 = vpop.f32.mrb[0].mxu0
    %v595 = vadd.f32 %v463, %v594
    %v596 = vpop.f32.mrb[0].mxu0
    %v597 = vpop.f32.mrb[0].mxu0
    %v598 = vadd.f32 %v463, %v597
    %v599 = vpop.f32.mrb[0].mxu0
    %600 = vmatprep.mubr.bf16.mxu0 0
    %601 = vmatmul.mubr.bf16.gmra.mrb[0].mxu0 %v441
    %v602 = vpop.f32.mrb[0].mxu0
    %v603 = vadd.f32 %v463, %v602
    %v604 = vpop.f32.mrb[0].mxu0
    %v605 = vpop.f32.mrb[0].mxu0
    %v606 = vadd.f32 %v463, %v605
    %v607 = vpop.f32.mrb[0].mxu0
    %608 = vdwg.mxu0
    %v609 = vmax.f32 %v547, 0.0
    %v610 = vmax.f32 %v550, 0.0
    %v611 = vmax.f32 %v555, 0.0
    %v612 = vmax.f32 %v558, 0.0
    %v613 = vmax.f32 %v563, 0.0
    %v614 = vmax.f32 %v566, 0.0
    %v615 = vmax.f32 %v571, 0.0
    %v616 = vmax.f32 %v574, 0.0
    %v617 = vmax.f32 %v579, 0.0
    %v618 = vmax.f32 %v582, 0.0
    %v619 = vmax.f32 %v587, 0.0
    %v620 = vmax.f32 %v590, 0.0
    %v621 = vmax.f32 %v595, 0.0
    %v622 = vmax.f32 %v598, 0.0
    %v623 = vmax.f32 %v603, 0.0
    %v624 = vmax.f32 %v606, 0.0
    %v625 = vpack.c.bf16 %v610, %v609
    %v626 = vpack.c.bf16 %v612, %v611
    %v627 = vpack.c.bf16 %v614, %v613
    %v628 = vpack.c.bf16 %v616, %v615
    %v629 = vpack.c.bf16 %v618, %v617
    %v630 = vpack.c.bf16 %v620, %v619
    %v631 = vpack.c.bf16 %v622, %v621
    %v632 = vpack.c.bf16 %v624, %v623
    %s633 = scalar_lea.vmem [#allocation3], 128
    %v634 = vld [vmem:[%s633] sm:$0xf]
    %v635 = vld [vmem:[%s633 + $0x4] sm:$0xf]
    %v636 = vld [vmem:[%s633 + $0x8] sm:$0xf]
    %v637 = vld [vmem:[%s633 + $0xc] sm:$0xf]
    %v638 = vld [vmem:[%s633 + $0x10] sm:$0xf]
    %v639 = vld [vmem:[%s633 + $0x14] sm:$0xf]
    %v640 = vld [vmem:[%s633 + $0x18] sm:$0xf]
    %v641 = vld [vmem:[%s633 + $0x1c] sm:$0xf]
    %v642 = vld [vmem:[%s633 + $0x20] sm:$0xf]
    %v643 = vld [vmem:[%s633 + $0x24] sm:$0xf]
    %v644 = vld [vmem:[%s633 + $0x28] sm:$0xf]
    %v645 = vld [vmem:[%s633 + $0x2c] sm:$0xf]
    %v646 = vld [vmem:[%s633 + $0x30] sm:$0xf]
    %v647 = vld [vmem:[%s633 + $0x34] sm:$0xf]
    %v648 = vld [vmem:[%s633 + $0x38] sm:$0xf]
    %v649 = vld [vmem:[%s633 + $0x3c] sm:$0xf]
    %v650 = vld [vmem:[%s4 + $0x3] sm:$0x1]
    %v651 = vlaneseq
    %v652 = vshrl.u32 %v651, 7
    %v653 = vsub.s32 0, %v652
    %v654 = vrot.slane %v650, %v653
    %v671 = vunpack.c.l.b16 %v634
    %v672 = vunpack.c.l.b16 %v635
    %v673 = vunpack.c.l.b16 %v636
    %v674 = vunpack.c.l.b16 %v637
    %v675 = vunpack.c.l.b16 %v638
    %v676 = vunpack.c.l.b16 %v639
    %v677 = vunpack.c.l.b16 %v640
    %v678 = vunpack.c.l.b16 %v641
    %v679 = vunpack.c.l.b16 %v642
    %v680 = vunpack.c.l.b16 %v643
    %v681 = vunpack.c.l.b16 %v644
    %v682 = vunpack.c.l.b16 %v645
    %v683 = vunpack.c.l.b16 %v646
    %v684 = vunpack.c.l.b16 %v647
    %v685 = vunpack.c.l.b16 %v648
    %v686 = vunpack.c.l.b16 %v649
    %v687 = vpack.c.b16 %v672, %v671
    %v688 = vpack.c.b16 %v674, %v673
    %v689 = vpack.c.b16 %v676, %v675
    %v690 = vpack.c.b16 %v678, %v677
    %v691 = vpack.c.b16 %v680, %v679
    %v692 = vpack.c.b16 %v682, %v681
    %v693 = vpack.c.b16 %v684, %v683
    %v694 = vpack.c.b16 %v686, %v685
    %703 = vmatprep.subr.bf16.mxu0 0
    %704 = vmatpush1.bf16.msra.mxu0 %v687
    %705 = vmatprep.subr.bf16.mxu0 0
    %706 = vmatpush1.bf16.msra.mxu0 %v688
    %707 = vmatprep.subr.bf16.mxu0 0
    %708 = vmatpush1.bf16.msra.mxu0 %v689
    %709 = vmatprep.subr.bf16.mxu0 0
    %710 = vmatpush1.bf16.msra.mxu0 %v690
    %711 = vmatprep.subr.bf16.mxu0 0
    %712 = vmatpush1.bf16.msra.mxu0 %v691
    %713 = vmatprep.subr.bf16.mxu0 0
    %714 = vmatpush1.bf16.msra.mxu0 %v692
    %715 = vmatprep.subr.bf16.mxu0 0
    %716 = vmatpush1.bf16.msra.mxu0 %v693
    %717 = vmatprep.subr.bf16.mxu0 0
    %718 = vmatpush1.bf16.msra.mxu0 %v694
    %719 = vmatprep.subr.bf16.mxu0 0
    %720 = vmatpush1.bf16.msra.mxu0 0
    %721 = vmatprep.subr.bf16.mxu0 0
    %722 = vmatpush1.bf16.msra.mxu0 0
    %723 = vmatprep.subr.bf16.mxu0 0
    %724 = vmatpush1.bf16.msra.mxu0 0
    %725 = vmatprep.subr.bf16.mxu0 0
    %726 = vmatpush1.bf16.msra.mxu0 0
    %727 = vmatprep.subr.bf16.mxu0 0
    %728 = vmatpush1.bf16.msra.mxu0 0
    %729 = vmatprep.subr.bf16.mxu0 0
    %730 = vmatpush1.bf16.msra.mxu0 0
    %731 = vmatprep.subr.bf16.mxu0 0
    %732 = vmatpush1.bf16.msra.mxu0 0
    %733 = vmatprep.subr.bf16.mxu0 0
    %734 = vmatpush1.bf16.msra.mxu0 0
    %735 = vmatprep.mubr.bf16.mxu0 0
    %736 = vmatmul.mubr.bf16.gmra.mrb[0].mxu0 %v625
    %v737 = vpop.f32.mrb[0].mxu0
    %v738 = vadd.f32 %v654, %v737
    %v739 = vpop.f32.mrb[0].mxu0
    %v740 = vpop.f32.mrb[0].mxu0
    %v741 = vadd.f32 %v654, %v740
    %v742 = vpop.f32.mrb[0].mxu0
    %743 = vmatprep.mubr.bf16.mxu0 0
    %744 = vmatmul.mubr.bf16.gmra.mrb[0].mxu0 %v626
    %v745 = vpop.f32.mrb[0].mxu0
    %v746 = vadd.f32 %v654, %v745
    %v747 = vpop.f32.mrb[0].mxu0
    %v748 = vpop.f32.mrb[0].mxu0
    %v749 = vadd.f32 %v654, %v748
    %v750 = vpop.f32.mrb[0].mxu0
    %751 = vmatprep.mubr.bf16.mxu0 0
    %752 = vmatmul.mubr.bf16.gmra.mrb[0].mxu0 %v627
    %v753 = vpop.f32.mrb[0].mxu0
    %v754 = vadd.f32 %v654, %v753
    %v755 = vpop.f32.mrb[0].mxu0
    %v756 = vpop.f32.mrb[0].mxu0
    %v757 = vadd.f32 %v654, %v756
    %v758 = vpop.f32.mrb[0].mxu0
    %759 = vmatprep.mubr.bf16.mxu0 0
    %760 = vmatmul.mubr.bf16.gmra.mrb[0].mxu0 %v628
    %v761 = vpop.f32.mrb[0].mxu0
    %v762 = vadd.f32 %v654, %v761
    %v763 = vpop.f32.mrb[0].mxu0
    %v764 = vpop.f32.mrb[0].mxu0
    %v765 = vadd.f32 %v654, %v764
    %v766 = vpop.f32.mrb[0].mxu0
    %767 = vmatprep.mubr.bf16.mxu0 0
    %768 = vmatmul.mubr.bf16.gmra.mrb[0].mxu0 %v629
    %v769 = vpop.f32.mrb[0].mxu0
    %v770 = vadd.f32 %v654, %v769
    %v771 = vpop.f32.mrb[0].mxu0
    %v772 = vpop.f32.mrb[0].mxu0
    %v773 = vadd.f32 %v654, %v772
    %v774 = vpop.f32.mrb[0].mxu0
    %775 = vmatprep.mubr.bf16.mxu0 0
    %776 = vmatmul.mubr.bf16.gmra.mrb[0].mxu0 %v630
    %v777 = vpop.f32.mrb[0].mxu0
    %v778 = vadd.f32 %v654, %v777
    %v779 = vpop.f32.mrb[0].mxu0
    %v780 = vpop.f32.mrb[0].mxu0
    %v781 = vadd.f32 %v654, %v780
    %v782 = vpop.f32.mrb[0].mxu0
    %783 = vmatprep.mubr.bf16.mxu0 0
    %784 = vmatmul.mubr.bf16.gmra.mrb[0].mxu0 %v631
    %v785 = vpop.f32.mrb[0].mxu0
    %v786 = vadd.f32 %v654, %v785
    %v787 = vpop.f32.mrb[0].mxu0
    %v788 = vpop.f32.mrb[0].mxu0
    %v789 = vadd.f32 %v654, %v788
    %v790 = vpop.f32.mrb[0].mxu0
    %791 = vmatprep.mubr.bf16.mxu0 0
    %792 = vmatmul.mubr.bf16.gmra.mrb[0].mxu0 %v632
    %v793 = vpop.f32.mrb[0].mxu0
    %v794 = vadd.f32 %v654, %v793
    %v795 = vpop.f32.mrb[0].mxu0
    %v796 = vpop.f32.mrb[0].mxu0
    %v797 = vadd.f32 %v654, %v796
    %v798 = vpop.f32.mrb[0].mxu0
    %799 = vdwg.mxu0
    %v800 = vmax.f32 %v738, 0.0
    %v801 = vmax.f32 %v741, 0.0
    %v802 = vmax.f32 %v746, 0.0
    %v803 = vmax.f32 %v749, 0.0
    %v804 = vmax.f32 %v754, 0.0
    %v805 = vmax.f32 %v757, 0.0
    %v806 = vmax.f32 %v762, 0.0
    %v807 = vmax.f32 %v765, 0.0
    %v808 = vmax.f32 %v770, 0.0
    %v809 = vmax.f32 %v773, 0.0
    %v810 = vmax.f32 %v778, 0.0
    %v811 = vmax.f32 %v781, 0.0
    %v812 = vmax.f32 %v786, 0.0
    %v813 = vmax.f32 %v789, 0.0
    %v814 = vmax.f32 %v794, 0.0
    %v815 = vmax.f32 %v797, 0.0
    %v816 = vld [vmem:[%s3] sm:$0xf]
    %v817 = vpack.c.bf16 %v801, %v800
    %v818 = vpack.c.bf16 %v803, %v802
    %v819 = vpack.c.bf16 %v805, %v804
    %v820 = vpack.c.bf16 %v807, %v806
    %v821 = vpack.c.bf16 %v809, %v808
    %v822 = vpack.c.bf16 %v811, %v810
    %v823 = vpack.c.bf16 %v813, %v812
    %v824 = vpack.c.bf16 %v815, %v814
    %825 = vmatprep.subr.bf16.mxu0 0
    %826 = vmatpush1.bf16.xpose.msra.mxu0 %v817
    %827 = vmatprep.subr.bf16.mxu0 0
    %828 = vmatpush1.bf16.xpose.msra.mxu0 %v818
    %829 = vmatprep.subr.bf16.mxu0 0
    %830 = vmatpush1.bf16.xpose.msra.mxu0 %v819
    %831 = vmatprep.subr.bf16.mxu0 0
    %832 = vmatpush1.bf16.xpose.msra.mxu0 %v820
    %833 = vmatprep.subr.bf16.mxu0 0
    %834 = vmatpush1.bf16.xpose.msra.mxu0 %v821
    %835 = vmatprep.subr.bf16.mxu0 0
    %836 = vmatpush1.bf16.xpose.msra.mxu0 %v822
    %837 = vmatprep.subr.bf16.mxu0 0
    %838 = vmatpush1.bf16.xpose.msra.mxu0 %v823
    %839 = vmatprep.subr.bf16.mxu0 0
    %840 = vmatpush1.bf16.xpose.msra.mxu0 %v824
    %841 = vmatprep.subr.bf16.mxu0 0
    %842 = vmatpush1.bf16.xpose.msra.mxu0 0
    %843 = vmatprep.subr.bf16.mxu0 0
    %844 = vmatpush1.bf16.xpose.msra.mxu0 0
    %845 = vmatprep.subr.bf16.mxu0 0
    %846 = vmatpush1.bf16.xpose.msra.mxu0 0
    %847 = vmatprep.subr.bf16.mxu0 0
    %848 = vmatpush1.bf16.xpose.msra.mxu0 0
    %849 = vmatprep.subr.bf16.mxu0 0
    %850 = vmatpush1.bf16.xpose.msra.mxu0 0
    %851 = vmatprep.subr.bf16.mxu0 0
    %852 = vmatpush1.bf16.xpose.msra.mxu0 0
    %853 = vmatprep.subr.bf16.mxu0 0
    %854 = vmatpush1.bf16.xpose.msra.mxu0 0
    %855 = vmatprep.subr.bf16.mxu0 0
    %856 = vmatpush1.bf16.xpose.msra.mxu0 0
    %857 = vmatprep.mubr.bf16.mxu0 0
    %858 = vmatmul.mubr.bf16.gmra.mrb[0].mxu0 %v816
    %v859 = vpop.f32.mrb[0].mxu0
    %v860 = vadd.f32 0.0, %v859
    %v861 = vpop.f32.mrb[0].mxu0
    %v862 = vpop.f32.mrb[0].mxu0
    %v863 = vpop.f32.mrb[0].mxu0
    %864 = vdwg.mxu0
    %s865 = sld [smem:[#allocation2]]
    %v866 = vstv %s865
    %v867 = vadd.f32 %v860, %v866
    %v868 = vsub.f32 0.0, %v867
    %v869 = vmul.f32 %v868, 1.442695
    %v870 = vpow.pop %v869
    %v871 = vadd.f32 %v870, 1.0
    %v872 = vrcp.pop %v871
    %873 = vst [vmem:[#allocation6] sm:$0x1] %v872
    // Predicated region
    $region30: #{tpu_custom_call.1} parent=1 // pred_check
      _
    $region31: #{tpu_custom_call.1} parent=1 // pred_check_branch
      %875 = sbr.rel (0) target = $region33
    $region32: #{tpu_custom_call.1} parent=1 // pred_region
      %s877 = ssub.s32 16, 16
      %878 = vsyncadd [#allocation5], %s877
      %s880 = sshll.u32 [#allocation6], 4
      %s881 = int_to_ptr.vmem [resolvable:$true] %s880
      %883 = dma.vmem_to_hbm [thread:$0]  %s881, 16, %s6, [#allocation5]
    $region33: #{tpu_custom_call.1} parent=1 // pred_fallthru
      _
    // Predicated region
    $region34: #{tpu_custom_call.1} parent=1 // pred_check
      _
    $region35: #{tpu_custom_call.1} parent=1 // pred_check_branch
      %885 = sbr.rel (0) target = $region37
    $region36: #{tpu_custom_call.1} parent=1 // pred_region
      %886 = dma.done [#allocation5], 16
    $region37: #{tpu_custom_call.1} parent=1 // pred_fallthru
      _
    %887 = vsyncpa [#allocation4], 1
    %888 = vsyncpa [#allocation5], 1

</llo_original>
